<compile_context>
chip_gen: v6e
topology: v6e:2x2x1
jax: 0.10.0
libtpu: 0.0.40
codegen_flags: <defaults>
</compile_context>

<pallas_src>
import math

import jax
import jax.numpy as jnp
import numpy as np
from jax.experimental import pallas as pl
from jax.experimental.pallas import tpu as pltpu

_HALF_LOG_2PI = 0.5 * math.log(2.0 * math.pi)
_LANES = 128
_DEFAULT_TILE_ROWS = 2048       # (2048, 128) f32 = 1 MiB block; ~85% HBM roofline
_SMALL_PROBLEM_ELEMS = 1 << 17  # below this, pallas_call launch cost dominates


def _cdiv(a, b):
    return -(-a // b)


def _sq_prior_kernel(x_ref, loc_ref, iscale_ref, lp_ref):
    """Per-tile partial sum of z^2, z = (X - loc) / scale, on the lane-dense layout."""
    x = x_ref[...].astype(jnp.float32)                 # (tile_rows, 128)
    z = (x - loc_ref[...]) * iscale_ref[...]           # (1,128) rows broadcast over sublanes
    # Reduce the row (sublane) axis only; lanes stay dense -> unmasked vst of (1,1,128).
    lp_ref[...] = jnp.sum(z * z, axis=0, keepdims=True).reshape(1, 1, _LANES)


def map_latent_forward(X, prior_loc, prior_scale, *, tile_rows=_DEFAULT_TILE_ROWS,
                       use_pallas=None):
    """MAPLatentVariable forward.

    Returns (X, prior_log_prob_sum) where the second value is the registered-prior
    term sum(Normal(prior_loc, prior_scale).log_prob(X)).  forward() itself is the
    identity on the parameter, so X is returned directly (no HBM round-trip).
    """
    n, d = X.shape
    total = n * d

    loc = prior_loc.reshape(-1).astype(jnp.float32)      # (d,)
    scale = prior_scale.reshape(-1).astype(jnp.float32)  # (d,)

    # Constant terms hoisted out of the per-element kernel math.
    const_term = -n * jnp.sum(jnp.log(scale)) - n * d * _HALF_LOG_2PI

    lane_dense_ok = (_LANES % d == 0)
    if use_pallas is None:
        use_pallas = lane_dense_ok and total >= _SMALL_PROBLEM_ELEMS
    if not lane_dense_ok:
        use_pallas = False  # latent_dim does not divide 128 -> plain XLA path

    if not use_pallas:
        # Small-problem / fallback path: plain XLA (fuses for free, no launch cost).
        z = (X.astype(jnp.float32) - loc) / scale
        return X, -0.5 * jnp.sum(z * z) + const_term

    # ---- lane-dense flat layout -------------------------------------------------
    rows = _cdiv(total, _LANES)
    if rows <= tile_rows:
        tile_rows = rows                       # single block == full extent (no pad rules)
    rows_padded = _cdiv(rows, tile_rows) * tile_rows
    num_tiles = rows_padded // tile_rows

    flat = X.reshape(-1)
    pad = rows_padded * _LANES - total
    if pad > 0:
        # Pad with the broadcast prior mean so padded z == 0 (exact no-op in the sum).
        pad_vals = jnp.tile(loc, _cdiv(pad, d))[:pad].astype(X.dtype)
        flat = jnp.concatenate([flat, pad_vals])
    x2d = flat.reshape(rows_padded, _LANES)

    reps = _LANES // d
    loc_row = jnp.tile(loc, reps).reshape(1, _LANES)
    iscale_row = jnp.tile(1.0 / scale, reps).reshape(1, _LANES)

    lp_partials = pl.pallas_call(
        _sq_prior_kernel,
        grid=(num_tiles,),
        in_specs=[
            pl.BlockSpec((tile_rows, _LANES), lambda i: (i, 0)),
            pl.BlockSpec((1, _LANES), lambda i: (0, 0)),   # replicated prior loc row
            pl.BlockSpec((1, _LANES), lambda i: (0, 0)),   # replicated 1/scale row
        ],
        out_specs=pl.BlockSpec((1, 1, _LANES), lambda i: (i, 0, 0)),
        out_shape=jax.ShapeDtypeStruct((num_tiles, 1, _LANES), jnp.float32),
        compiler_params=pltpu.CompilerParams(
            dimension_semantics=("parallel",)),            # independent per-tile partials
    )(x2d, loc_row, iscale_row)

    return X, -0.5 * jnp.sum(lp_partials) + const_term


def ref_forward(X, prior_loc, prior_scale):
    """Pure-JAX reference mirroring the PyTorch module (+ its registered prior term)."""
    loc = prior_loc.reshape(-1)
    scale = prior_scale.reshape(-1)
    z = (X.astype(jnp.float32) - loc) / scale
    lp = -0.5 * z * z - jnp.log(scale) - _HALF_LOG_2PI
    return X, jnp.sum(lp)


if __name__ == "__main__":
    key = jax.random.PRNGKey(0)
    k1, k2 = jax.random.split(key)

    # Case 1: GPLVM-style latent parameter; single lane-dense (128, 128) block.
    n1, d1 = 2048, 8
    X1 = 0.1 * jax.random.normal(k1, (n1, d1), jnp.float32)
    loc1 = jnp.zeros((1, d1), jnp.float32)
    scale1 = jnp.ones((1, d1), jnp.float32)
    x_out1, lp1 = map_latent_forward(X1, loc1, scale1, use_pallas=True)
    jax.block_until_ready((x_out1, lp1))
    _, lp1_ref = ref_forward(X1, loc1, scale1)
    np.testing.assert_array_equal(np.asarray(x_out1), np.asarray(X1))
    np.testing.assert_allclose(np.asarray(lp1), np.asarray(lp1_ref), rtol=1e-4, atol=1e-2)

    # Case 2: flat length not a multiple of 128 + multi-tile grid (exercises padding).
    n2, d2 = 1000, 4
    X2 = jax.random.normal(k2, (n2, d2), jnp.float32)
    loc2 = 0.25 * jnp.ones((1, d2), jnp.float32)
    scale2 = 0.5 * jnp.ones((1, d2), jnp.float32)
    x_out2, lp2 = map_latent_forward(X2, loc2, scale2, tile_rows=8, use_pallas=True)
    jax.block_until_ready((x_out2, lp2))
    _, lp2_ref = ref_forward(X2, loc2, scale2)
    np.testing.assert_array_equal(np.asarray(x_out2), np.asarray(X2))
    np.testing.assert_allclose(np.asarray(lp2), np.asarray(lp2_ref), rtol=1e-4, atol=1e-2)

    print("KERNEL_OK")
</pallas_src>

<mosaic_0001>
module attributes {stable_mosaic.version = 11 : i64} {
  func.func @_sq_prior_kernel(%arg0: i32, %arg1: memref<128x128xf32, #tpu.memory_space<vmem>>, %arg2: memref<1x128xf32, #tpu.memory_space<vmem>>, %arg3: memref<1x128xf32, #tpu.memory_space<vmem>>, %arg4: memref<1x1x128xf32, #tpu.memory_space<vmem>>) attributes {dimension_semantics = [#tpu.dimension_semantics<parallel>], iteration_bounds = array<i64: 1>, scalar_prefetch = 0 : i64, scratch_operands = 0 : i64, tpu.core_type = #tpu.core_type<tc>, window_params = [{transform_indices = @transform_0, window_bounds = array<i64: 128, 128>}, {pipeline_mode = #tpu.pipeline_mode<synchronous>, transform_indices = @transform_1, window_bounds = array<i64: 1, 128>}, {pipeline_mode = #tpu.pipeline_mode<synchronous>, transform_indices = @transform_2, window_bounds = array<i64: 1, 128>}, {transform_indices = @transform_3, window_bounds = array<i64: 1, 1, 128>}]} {
    %c0 = arith.constant 0 : index
    %c0_0 = arith.constant 0 : index
    %0 = vector.load %arg1[%c0, %c0_0] : memref<128x128xf32, #tpu.memory_space<vmem>>, vector<128x128xf32>
    %c0_1 = arith.constant 0 : index
    %c0_2 = arith.constant 0 : index
    %1 = vector.load %arg2[%c0_1, %c0_2] : memref<1x128xf32, #tpu.memory_space<vmem>>, vector<1x128xf32>
    %2 = vector.broadcast %1 : vector<1x128xf32> to vector<128x128xf32>
    %3 = arith.subf %0, %2 : vector<128x128xf32>
    %c0_3 = arith.constant 0 : index
    %c0_4 = arith.constant 0 : index
    %4 = vector.load %arg3[%c0_3, %c0_4] : memref<1x128xf32, #tpu.memory_space<vmem>>, vector<1x128xf32>
    %5 = vector.broadcast %4 : vector<1x128xf32> to vector<128x128xf32>
    %6 = arith.mulf %3, %5 : vector<128x128xf32>
    %7 = arith.mulf %6, %6 : vector<128x128xf32>
    %cst = arith.constant dense<0.000000e+00> : vector<128xf32>
    %8 = vector.multi_reduction <add>, %7, %cst [0] : vector<128x128xf32> to vector<128xf32>
    %9 = vector.shape_cast %8 : vector<128xf32> to vector<1x128xf32>
    %10 = vector.shape_cast %9 : vector<1x128xf32> to vector<1x1x128xf32>
    %c0_5 = arith.constant 0 : index
    %c0_6 = arith.constant 0 : index
    %c0_7 = arith.constant 0 : index
    %11 = vector.load %arg4[%c0_5, %c0_6, %c0_7] : memref<1x1x128xf32, #tpu.memory_space<vmem>>, vector<1x1x128xf32>
    tpu.vector_store %arg4[%c0_5, %c0_6, %c0_7], %10 {strides = array<i32>} : memref<1x1x128xf32, #tpu.memory_space<vmem>>, vector<1x1x128xf32>,
    return
  }
  func.func @transform_0(%arg0: i32) -> (i32, i32) {
    %c0_i32 = arith.constant 0 : i32
    %c0_i32_0 = arith.constant 0 : i32
    return %arg0, %c0_i32 : i32, i32
  }
  func.func @transform_1(%arg0: i32) -> (i32, i32) {
    %c0_i32 = arith.constant 0 : i32
    %c0_i32_0 = arith.constant 0 : i32
    %c0_i32_1 = arith.constant 0 : i32
    return %c0_i32, %c0_i32_0 : i32, i32
  }
  func.func @transform_2(%arg0: i32) -> (i32, i32) {
    %c0_i32 = arith.constant 0 : i32
    %c0_i32_0 = arith.constant 0 : i32
    %c0_i32_1 = arith.constant 0 : i32
    return %c0_i32, %c0_i32_0 : i32, i32
  }
  func.func @transform_3(%arg0: i32) -> (i32, i32, i32) {
    %c0_i32 = arith.constant 0 : i32
    %c0_i32_0 = arith.constant 0 : i32
    %c0_i32_1 = arith.constant 0 : i32
    return %arg0, %c0_i32, %c0_i32_0 : i32, i32, i32
  }
}

</mosaic_0001>

<llo_original>
// kernel: tpu_custom_call.1
$region0: #{tpu_custom_call.1}
  #allocation0 [shape = 'u32[]', space=smem, size = 0x4, offset = 0x4, fixed_abs, tag = 'smem constant byte address 0x4 - core index']
  #allocation1 [shape = 'u32[144,128]{1,0:T(1,128)}', space=vmem, size = 0x12000, scoped, tag = 'internal scratch']
  %s0 = inlined_call_operand.hbm [shape: f32[128,128], index: 0, kind: input, shape index: {}]
  %s1 = inlined_call_operand.vmem [shape: f32[1,128], index: 1, kind: input, shape index: {}]
  %s2 = inlined_call_operand.vmem [shape: f32[1,128], index: 2, kind: input, shape index: {}]
  %s3 = inlined_call_operand.hbm [shape: f32[1,1,128], index: 3, kind: output, shape index: {}]
  %s4 = sld [smem:[#allocation0]]
  $region26: #{tpu_custom_call.1} parent=0
    _
  %s6 = ssub.s32 1, %s4
  %s7 = scalar_select 0, %s6, %s4
  $region1: #{tpu_custom_call.1} parent=0
    #allocation2 [shape = 'u8[65536]{0}', space=vmem, size = 0x10000, scoped, tag = 'input window, operand 0, single buffered']
    #allocation3 [shape = 's32[1]{0}', space=sflag, size = 0x4, scoped, tag = 'scoped memory for tpu_custom_call.1']
    #allocation4 [shape = 's32[1]{0}', space=sflag, size = 0x4, scoped, tag = 'scoped memory for tpu_custom_call.1']
    #allocation5 [shape = 'u8[512]{0}', space=vmem, size = 0x400, scoped, tag = 'output window, operand 0, single buffered']
    %8 = vsyncpa [#allocation3], 0
    %9 = vsyncpa [#allocation4], 0
    // Predicated region
    $region2: #{tpu_custom_call.1} parent=1 // pred_check
      _
    $region3: #{tpu_custom_call.1} parent=1 // pred_check_branch
      %11 = sbr.rel (0) target = $region5
    $region4: #{tpu_custom_call.1} parent=1 // pred_region
      %s13 = ssub.s32 2048, 2048
      %14 = vsyncadd [#allocation3], %s13
      %s15 = sshll.u32 [#allocation2], 4
      %s16 = int_to_ptr.vmem [resolvable:$true] %s15
      %21 = dma.hbm_to_vmem [thread:$0]  %s0, 2048, %s16, [#allocation3], 128, 128, 8
    $region5: #{tpu_custom_call.1} parent=1 // pred_fallthru
      _
    // Predicated region
    $region6: #{tpu_custom_call.1} parent=1 // pred_check
      _
    $region7: #{tpu_custom_call.1} parent=1 // pred_check_branch
      %23 = sbr.rel (0) target = $region9
    $region8: #{tpu_custom_call.1} parent=1 // pred_region
      _
    $region9: #{tpu_custom_call.1} parent=1 // pred_fallthru
      _
    // Predicated region
    $region10: #{tpu_custom_call.1} parent=1 // pred_check
      _
    $region11: #{tpu_custom_call.1} parent=1 // pred_check_branch
      %25 = sbr.rel (0) target = $region13
    $region12: #{tpu_custom_call.1} parent=1 // pred_region
      _
    $region13: #{tpu_custom_call.1} parent=1 // pred_fallthru
      _
    // Predicated region
    $region14: #{tpu_custom_call.1} parent=1 // pred_check
      _
    $region15: #{tpu_custom_call.1} parent=1 // pred_check_branch
      %27 = sbr.rel (0) target = $region17
    $region16: #{tpu_custom_call.1} parent=1 // pred_region
      %28 = dma.done [#allocation3], 2048
    $region17: #{tpu_custom_call.1} parent=1 // pred_fallthru
      _
    %v29 = vld [vmem:[#allocation2] sm:$0xff]
    %v30 = vld [vmem:[#allocation2 + $0x8] sm:$0xff]
    %v31 = vld [vmem:[#allocation2 + $0x10] sm:$0xff]
    %v32 = vld [vmem:[#allocation2 + $0x18] sm:$0xff]
    %v33 = vld [vmem:[#allocation2 + $0x20] sm:$0xff]
    %v34 = vld [vmem:[#allocation2 + $0x28] sm:$0xff]
    %v35 = vld [vmem:[#allocation2 + $0x30] sm:$0xff]
    %v36 = vld [vmem:[#allocation2 + $0x38] sm:$0xff]
    %v37 = vld [vmem:[#allocation2 + $0x40] sm:$0xff]
    %v38 = vld [vmem:[#allocation2 + $0x48] sm:$0xff]
    %v39 = vld [vmem:[#allocation2 + $0x50] sm:$0xff]
    %v40 = vld [vmem:[#allocation2 + $0x58] sm:$0xff]
    %v41 = vld [vmem:[#allocation2 + $0x60] sm:$0xff]
    %v42 = vld [vmem:[#allocation2 + $0x68] sm:$0xff]
    %v43 = vld [vmem:[#allocation2 + $0x70] sm:$0xff]
    %v44 = vld [vmem:[#allocation2 + $0x78] sm:$0xff]
    %v45 = vld [vmem:[%s1] sm:$0x1]
    %v47 = vlaneseq
    %v48 = vshrl.u32 %v47, 7
    %v49 = vsub.s32 0, %v48
    %v50 = vrot.slane %v45, %v49
    %v52 = vsub.f32 %v29, %v50
    %v53 = vsub.f32 %v30, %v50
    %v54 = vsub.f32 %v31, %v50
    %v55 = vsub.f32 %v32, %v50
    %v56 = vsub.f32 %v33, %v50
    %v57 = vsub.f32 %v34, %v50
    %v58 = vsub.f32 %v35, %v50
    %v59 = vsub.f32 %v36, %v50
    %v60 = vsub.f32 %v37, %v50
    %v61 = vsub.f32 %v38, %v50
    %v62 = vsub.f32 %v39, %v50
    %v63 = vsub.f32 %v40, %v50
    %v64 = vsub.f32 %v41, %v50
    %v65 = vsub.f32 %v42, %v50
    %v66 = vsub.f32 %v43, %v50
    %v67 = vsub.f32 %v44, %v50
    %v68 = vld [vmem:[%s2] sm:$0x1]
    %v70 = vlaneseq
    %v71 = vshrl.u32 %v70, 7
    %v72 = vsub.s32 0, %v71
    %v73 = vrot.slane %v68, %v72
    %v75 = vmul.f32 %v52, %v73
    %v76 = vmul.f32 %v53, %v73
    %v77 = vmul.f32 %v54, %v73
    %v78 = vmul.f32 %v55, %v73
    %v79 = vmul.f32 %v56, %v73
    %v80 = vmul.f32 %v57, %v73
    %v81 = vmul.f32 %v58, %v73
    %v82 = vmul.f32 %v59, %v73
    %v83 = vmul.f32 %v60, %v73
    %v84 = vmul.f32 %v61, %v73
    %v85 = vmul.f32 %v62, %v73
    %v86 = vmul.f32 %v63, %v73
    %v87 = vmul.f32 %v64, %v73
    %v88 = vmul.f32 %v65, %v73
    %v89 = vmul.f32 %v66, %v73
    %v90 = vmul.f32 %v67, %v73
    %v91 = vmul.f32 %v75, %v75
    %v92 = vmul.f32 %v76, %v76
    %v93 = vmul.f32 %v77, %v77
    %v94 = vmul.f32 %v78, %v78
    %v95 = vmul.f32 %v79, %v79
    %v96 = vmul.f32 %v80, %v80
    %v97 = vmul.f32 %v81, %v81
    %v98 = vmul.f32 %v82, %v82
    %v99 = vmul.f32 %v83, %v83
    %v100 = vmul.f32 %v84, %v84
    %v101 = vmul.f32 %v85, %v85
    %v102 = vmul.f32 %v86, %v86
    %v103 = vmul.f32 %v87, %v87
    %v104 = vmul.f32 %v88, %v88
    %v105 = vmul.f32 %v89, %v89
    %v106 = vmul.f32 %v90, %v90
    %v107 = vadd.f32 %v91, %v92
    %v108 = vadd.f32 %v107, %v93
    %v109 = vadd.f32 %v108, %v94
    %v110 = vadd.f32 %v109, %v95
    %v111 = vadd.f32 %v110, %v96
    %v112 = vadd.f32 %v111, %v97
    %v113 = vadd.f32 %v112, %v98
    %v114 = vadd.f32 %v113, %v99
    %v115 = vadd.f32 %v114, %v100
    %v116 = vadd.f32 %v115, %v101
    %v117 = vadd.f32 %v116, %v102
    %v118 = vadd.f32 %v117, %v103
    %v119 = vadd.f32 %v118, %v104
    %v120 = vadd.f32 %v119, %v105
    %v121 = vadd.f32 %v120, %v106
    %v122 = vrot.slane %v121, 4
    %v123 = vadd.f32 %v121, %v122
    %v124 = vrot.slane %v123, 2
    %v125 = vadd.f32 %v123, %v124
    %v126 = vrot.slane %v125, 1
    %v127 = vadd.f32 %v125, %v126
    %128 = vst [vmem:[#allocation5] sm:$0x1] %v127
    // Predicated region
    $region18: #{tpu_custom_call.1} parent=1 // pred_check
      _
    $region19: #{tpu_custom_call.1} parent=1 // pred_check_branch
      %130 = sbr.rel (0) target = $region21
    $region20: #{tpu_custom_call.1} parent=1 // pred_region
      %s132 = ssub.s32 16, 16
      %133 = vsyncadd [#allocation4], %s132
      %s135 = sshll.u32 [#allocation5], 4
      %s136 = int_to_ptr.vmem [resolvable:$true] %s135
      %138 = dma.vmem_to_hbm [thread:$0]  %s136, 16, %s3, [#allocation4]
    $region21: #{tpu_custom_call.1} parent=1 // pred_fallthru
      _
    // Predicated region
    $region22: #{tpu_custom_call.1} parent=1 // pred_check
      _
    $region23: #{tpu_custom_call.1} parent=1 // pred_check_branch
      %140 = sbr.rel (0) target = $region25
    $region24: #{tpu_custom_call.1} parent=1 // pred_region
      %141 = dma.done [#allocation4], 16
    $region25: #{tpu_custom_call.1} parent=1 // pred_fallthru
      _
    %142 = vsyncpa [#allocation3], 1
    %143 = vsyncpa [#allocation4], 1

</llo_original>
